<compile_context>
chip_gen: v7x
topology: tpu7x:2x2x1
jax: 0.10.0
libtpu: 0.0.40
codegen_flags: <defaults>
</compile_context>

<pallas_src>
import functools

import jax
import jax.numpy as jnp
from jax.experimental import pallas as pl
from jax.experimental.pallas import tpu as pltpu


def _round_up(x: int, m: int) -> int:
    return ((x + m - 1) // m) * m


def _mlp_kernel(x_ref, w1_ref, b1_ref, w2_ref, b2_ref, o_ref):
    # Hidden layer: relu(x @ W1 + b1).
    # x/W1 are bf16 -> single-pass MXU matmul with f32 accumulation; the bias add
    # and ReLU run in f32 on the VPU (v5e's VPU has no bf16).
    h = jnp.maximum(
        jnp.dot(x_ref[...], w1_ref[...], preferred_element_type=jnp.float32)
        + b1_ref[...],
        0.0,
    )
    # Output layer: h @ W2 + b2. Cast h back to the weight dtype (bf16) so the
    # second MXU pass and any h spill traffic stay half-width.
    y = (
        jnp.dot(h.astype(w2_ref.dtype), w2_ref[...],
                preferred_element_type=jnp.float32)
        + b2_ref[...]
    )
    o_ref[...] = y.astype(o_ref.dtype)


@functools.partial(jax.jit, static_argnames=("max_batch_tile",))
def deep_qnet_forward(x, w1, b1, w2, b2, *, max_batch_tile: int = 2048):
    """Fused two-layer MLP forward (Linear -> ReLU -> Linear) in one Pallas kernel.

    x : (B, in)          w1: (in, hidden)   b1: (1, hidden)
    w2: (hidden, out)    b2: (1, out)       returns (B, out) in x.dtype
    """
    B, in_size = x.shape
    hidden = w1.shape[1]
    out_size = w2.shape[1]
    out_dtype = x.dtype

    # --- cast MXU operands to bf16 (f32 accumulation happens in-kernel) ---------
    x_c = x.astype(jnp.bfloat16)
    w1_c = w1.astype(jnp.bfloat16)
    w2_c = w2.astype(jnp.bfloat16)
    b1_c = b1.astype(jnp.float32)
    b2_c = b2.astype(jnp.float32)

    # --- pad only the (tiny) hidden dim of the weights to 128 lanes -------------
    # x (B, in) and the output (B, out) stay unpadded in the lane dim: their block
    # last dims equal the full array dims, which is legal and avoids activation
    # pad/slice HBM roundtrips. Zero-padding of W/b is numerically inert.
    hid_p = _round_up(hidden, 128)
    w1_p = jnp.pad(w1_c, ((0, 0), (0, hid_p - hidden)))
    b1_p = jnp.pad(b1_c, ((0, 0), (0, hid_p - hidden)))
    w2_p = jnp.pad(w2_c, ((0, hid_p - hidden), (0, 0)))

    # --- pick batch tile ---------------------------------------------------------
    # Multiple of 8 (sublane). For batches bigger than one sublane row-group we
    # split into >=2 tiles so the "parallel" grid axis gives v7x's two TensorCores
    # work; the cap (default 2048) keeps per-block VMEM tiny on every generation
    # (bf16 x block 2048x16 = 64 KiB, f32 out block 2048x4 = 32 KiB, weights
    # ~70 KiB -- well under the 16-32 MiB default scoped VMEM, even double-buffered).
    B8 = _round_up(B, 8)
    if B8 <= 8:
        TB = 8
    else:
        TB = min(max_batch_tile, _round_up(-(-B8 // 2), 8))
    B_p = _round_up(B8, TB)

    x_p = jnp.pad(x_c, ((0, B_p - B), (0, 0))) if B_p != B else x_c

    grid = (B_p // TB,)

    out_padded = pl.pallas_call(
        _mlp_kernel,
        out_shape=jax.ShapeDtypeStruct((B_p, out_size), out_dtype),
        grid_spec=pl.GridSpec(
            grid=grid,
            in_specs=[
                # activations: walk the batch axis, unpadded feature dim
                pl.BlockSpec((TB, in_size), lambda i: (i, 0)),
                # weights / biases: constant index_map -> resident across all tiles
                pl.BlockSpec((in_size, hid_p), lambda i: (0, 0)),
                pl.BlockSpec((1, hid_p), lambda i: (0, 0)),
                pl.BlockSpec((hid_p, out_size), lambda i: (0, 0)),
                pl.BlockSpec((1, out_size), lambda i: (0, 0)),
            ],
            # output unpadded in the lane dim: (TB, out_size) block, contiguous in HBM
            out_specs=pl.BlockSpec((TB, out_size), lambda i: (i, 0)),
        ),
        compiler_params=pltpu.CompilerParams(
            # batch tiles are independent -> shard across TCs on v7x (no-op on v5e/v6e)
            dimension_semantics=("parallel",),
        ),
    )(x_p, w1_p, b1_p, w2_p, b2_c)

    # strip only the padded batch rows (no lane padding to strip)
    return out_padded[:B] if B_p != B else out_padded


def init_deep_qnet_params(key, input_size, hidden_size, output_size,
                          dtype=jnp.float32):
    """Deterministic init mirroring PyTorch nn.Linear default:
    U(-1/sqrt(fan_in), 1/sqrt(fan_in)) for both weights and biases."""
    k1, k2, k3, k4 = jax.random.split(key, 4)
    bound1 = 1.0 / (input_size ** 0.5)
    bound2 = 1.0 / (hidden_size ** 0.5)
    # Stored as (in, out) == transpose of PyTorch's (out, in) weight layout.
    w1 = jax.random.uniform(k1, (input_size, hidden_size), dtype,
                            minval=-bound1, maxval=bound1)
    b1 = jax.random.uniform(k2, (1, hidden_size), dtype,
                            minval=-bound1, maxval=bound1)
    w2 = jax.random.uniform(k3, (hidden_size, output_size), dtype,
                            minval=-bound2, maxval=bound2)
    b2 = jax.random.uniform(k4, (1, output_size), dtype,
                            minval=-bound2, maxval=bound2)
    return w1, b1, w2, b2


def reference_forward(x, w1, b1, w2, b2):
    h = jnp.maximum(x @ w1 + b1, 0.0)
    return h @ w2 + b2


if __name__ == "__main__":
    # Shapes consistent with the Deep_QNet module (state -> hidden -> actions).
    input_size, hidden_size, output_size = 16, 32, 4

    key = jax.random.PRNGKey(0)
    kx, kp = jax.random.split(key)
    w1, b1, w2, b2 = init_deep_qnet_params(kp, input_size, hidden_size,
                                           output_size)

    # Tolerances account for the bf16 MXU path (inputs/weights rounded to bf16,
    # accumulation still f32).
    ATOL = RTOL = 3e-2

    # Small single-tile case (typical single-transition inference batch).
    x_small = jax.random.normal(kx, (8, input_size), jnp.float32)
    out_small = jax.block_until_ready(deep_qnet_forward(x_small, w1, b1, w2, b2))
    ref_small = reference_forward(x_small, w1, b1, w2, b2)
    assert out_small.shape == (8, output_size)
    assert jnp.allclose(out_small, ref_small, atol=ATOL, rtol=RTOL), \
        "small-batch mismatch vs reference"

    # Larger, non-multiple batch: exercises batch padding + multi-tile grid
    # (replay-buffer style batch) and the >=2-tile split for v7x megacore.
    x_big = jax.random.normal(kx, (600, input_size), jnp.float32)
    out_big = jax.block_until_ready(deep_qnet_forward(x_big, w1, b1, w2, b2))
    ref_big = reference_forward(x_big, w1, b1, w2, b2)
    assert out_big.shape == (600, output_size)
    assert jnp.allclose(out_big, ref_big, atol=ATOL, rtol=RTOL), \
        "large-batch mismatch vs reference"

    print("KERNEL_OK")
</pallas_src>

<mosaic_0001>
module attributes {stable_mosaic.version = 11 : i64} {
  func.func @_mlp_kernel(%arg0: i32, %arg1: memref<8x16xbf16, #tpu.memory_space<vmem>>, %arg2: memref<16x128xbf16, #tpu.memory_space<vmem>>, %arg3: memref<1x128xf32, #tpu.memory_space<vmem>>, %arg4: memref<128x4xbf16, #tpu.memory_space<vmem>>, %arg5: memref<1x4xf32, #tpu.memory_space<vmem>>, %arg6: memref<8x4xf32, #tpu.memory_space<vmem>>) attributes {dimension_semantics = [#tpu.dimension_semantics<parallel>], iteration_bounds = array<i64: 1>, scalar_prefetch = 0 : i64, scratch_operands = 0 : i64, tpu.core_type = #tpu.core_type<tc>, window_params = [{transform_indices = @transform_0, window_bounds = array<i64: 8, 16>}, {pipeline_mode = #tpu.pipeline_mode<synchronous>, transform_indices = @transform_1, window_bounds = array<i64: 16, 128>}, {pipeline_mode = #tpu.pipeline_mode<synchronous>, transform_indices = @transform_2, window_bounds = array<i64: 1, 128>}, {pipeline_mode = #tpu.pipeline_mode<synchronous>, transform_indices = @transform_3, window_bounds = array<i64: 128, 4>}, {pipeline_mode = #tpu.pipeline_mode<synchronous>, transform_indices = @transform_4, window_bounds = array<i64: 1, 4>}, {transform_indices = @transform_5, window_bounds = array<i64: 8, 4>}]} {
    %c0 = arith.constant 0 : index
    %c0_0 = arith.constant 0 : index
    %0 = vector.load %arg1[%c0, %c0_0] : memref<8x16xbf16, #tpu.memory_space<vmem>>, vector<8x16xbf16>
    %c0_1 = arith.constant 0 : index
    %c0_2 = arith.constant 0 : index
    %1 = vector.load %arg2[%c0_1, %c0_2] : memref<16x128xbf16, #tpu.memory_space<vmem>>, vector<16x128xbf16>
    %cst = arith.constant dense<0.000000e+00> : vector<8x128xf32>
    %2 = tpu.matmul %0, %1, %cst {dimension_numbers = #tpu.dot_dimension_numbers<[1], [0], [0], [1], [0, 0, 1, 1], [], []>} : vector<8x16xbf16>, vector<16x128xbf16>, vector<8x128xf32> -> vector<8x128xf32>
    %c0_3 = arith.constant 0 : index
    %c0_4 = arith.constant 0 : index
    %3 = vector.load %arg3[%c0_3, %c0_4] : memref<1x128xf32, #tpu.memory_space<vmem>>, vector<1x128xf32>
    %4 = vector.broadcast %3 : vector<1x128xf32> to vector<8x128xf32>
    %5 = arith.addf %2, %4 : vector<8x128xf32>
    %cst_5 = arith.constant 0.000000e+00 : f32
    %6 = vector.broadcast %cst_5 : f32 to vector<8x128xf32>
    %7 = arith.maximumf %5, %6 : vector<8x128xf32>
    %8 = arith.truncf %7 : vector<8x128xf32> to vector<8x128xbf16>
    %c0_6 = arith.constant 0 : index
    %c0_7 = arith.constant 0 : index
    %9 = vector.load %arg4[%c0_6, %c0_7] : memref<128x4xbf16, #tpu.memory_space<vmem>>, vector<128x4xbf16>
    %cst_8 = arith.constant dense<0.000000e+00> : vector<8x4xf32>
    %10 = tpu.matmul %8, %9, %cst_8 {dimension_numbers = #tpu.dot_dimension_numbers<[1], [0], [0], [1], [0, 0, 1, 1], [], []>} : vector<8x128xbf16>, vector<128x4xbf16>, vector<8x4xf32> -> vector<8x4xf32>
    %c0_9 = arith.constant 0 : index
    %c0_10 = arith.constant 0 : index
    %11 = vector.load %arg5[%c0_9, %c0_10] : memref<1x4xf32, #tpu.memory_space<vmem>>, vector<1x4xf32>
    %12 = vector.broadcast %11 : vector<1x4xf32> to vector<8x4xf32>
    %13 = arith.addf %10, %12 : vector<8x4xf32>
    %c0_11 = arith.constant 0 : index
    %c0_12 = arith.constant 0 : index
    %14 = vector.load %arg6[%c0_11, %c0_12] : memref<8x4xf32, #tpu.memory_space<vmem>>, vector<8x4xf32>
    tpu.vector_store %arg6[%c0_11, %c0_12], %13 {strides = array<i32>} : memref<8x4xf32, #tpu.memory_space<vmem>>, vector<8x4xf32>,
    return
  }
  func.func @transform_0(%arg0: i32) -> (i32, i32) {
    %c0_i32 = arith.constant 0 : i32
    %c0_i32_0 = arith.constant 0 : i32
    return %arg0, %c0_i32 : i32, i32
  }
  func.func @transform_1(%arg0: i32) -> (i32, i32) {
    %c0_i32 = arith.constant 0 : i32
    %c0_i32_0 = arith.constant 0 : i32
    %c0_i32_1 = arith.constant 0 : i32
    return %c0_i32, %c0_i32_0 : i32, i32
  }
  func.func @transform_2(%arg0: i32) -> (i32, i32) {
    %c0_i32 = arith.constant 0 : i32
    %c0_i32_0 = arith.constant 0 : i32
    %c0_i32_1 = arith.constant 0 : i32
    return %c0_i32, %c0_i32_0 : i32, i32
  }
  func.func @transform_3(%arg0: i32) -> (i32, i32) {
    %c0_i32 = arith.constant 0 : i32
    %c0_i32_0 = arith.constant 0 : i32
    %c0_i32_1 = arith.constant 0 : i32
    return %c0_i32, %c0_i32_0 : i32, i32
  }
  func.func @transform_4(%arg0: i32) -> (i32, i32) {
    %c0_i32 = arith.constant 0 : i32
    %c0_i32_0 = arith.constant 0 : i32
    %c0_i32_1 = arith.constant 0 : i32
    return %c0_i32, %c0_i32_0 : i32, i32
  }
  func.func @transform_5(%arg0: i32) -> (i32, i32) {
    %c0_i32 = arith.constant 0 : i32
    %c0_i32_0 = arith.constant 0 : i32
    return %arg0, %c0_i32 : i32, i32
  }
}

</mosaic_0001>

<llo_original>
// kernel: deep_qnet_forward.1
$region0: #{deep_qnet_forward.1}
  #allocation0 [shape = 'u32[]', space=smem, size = 0x4, offset = 0x4, fixed_abs, tag = 'smem constant byte address 0x4 - core index']
  #allocation1 [shape = 'u32[144,128]{1,0:T(1,128)}', space=vmem, size = 0x12000, scoped, tag = 'internal scratch']
  %s0 = inlined_call_operand.vmem [shape: bf16[8,16], index: 0, kind: input, shape index: {}]
  %s1 = inlined_call_operand.vmem [shape: bf16[16,128], index: 1, kind: input, shape index: {}]
  %s2 = inlined_call_operand.vmem [shape: f32[1,128], index: 2, kind: input, shape index: {}]
  %s3 = inlined_call_operand.vmem [shape: bf16[128,4], index: 3, kind: input, shape index: {}]
  %s4 = inlined_call_operand.vmem [shape: f32[1,4], index: 4, kind: input, shape index: {}]
  %s5 = inlined_call_operand.vmem [shape: f32[8,4], index: 5, kind: output, shape index: {}]
  %s6 = sld [smem:[#allocation0]]
  $region30: #{deep_qnet_forward.1} parent=0
    _
  %s8 = ssub.s32 1, %s6
  %s9 = scalar_select 0, %s8, %s6
  // Predicated region
  $region2: #{deep_qnet_forward.1} parent=0 // pred_check
    _
  $region3: #{deep_qnet_forward.1} parent=0 // pred_check_branch
    %11 = sbr.rel (0) target = $region5
  $region4: #{deep_qnet_forward.1} parent=0 // pred_region
    _
  $region5: #{deep_qnet_forward.1} parent=0 // pred_fallthru
    _
  // Predicated region
  $region6: #{deep_qnet_forward.1} parent=0 // pred_check
    _
  $region7: #{deep_qnet_forward.1} parent=0 // pred_check_branch
    %13 = sbr.rel (0) target = $region9
  $region8: #{deep_qnet_forward.1} parent=0 // pred_region
    _
  $region9: #{deep_qnet_forward.1} parent=0 // pred_fallthru
    _
  // Predicated region
  $region10: #{deep_qnet_forward.1} parent=0 // pred_check
    _
  $region11: #{deep_qnet_forward.1} parent=0 // pred_check_branch
    %15 = sbr.rel (0) target = $region13
  $region12: #{deep_qnet_forward.1} parent=0 // pred_region
    _
  $region13: #{deep_qnet_forward.1} parent=0 // pred_fallthru
    _
  // Predicated region
  $region14: #{deep_qnet_forward.1} parent=0 // pred_check
    _
  $region15: #{deep_qnet_forward.1} parent=0 // pred_check_branch
    %17 = sbr.rel (0) target = $region17
  $region16: #{deep_qnet_forward.1} parent=0 // pred_region
    _
  $region17: #{deep_qnet_forward.1} parent=0 // pred_fallthru
    _
  // Predicated region
  $region18: #{deep_qnet_forward.1} parent=0 // pred_check
    _
  $region19: #{deep_qnet_forward.1} parent=0 // pred_check_branch
    %19 = sbr.rel (0) target = $region21
  $region20: #{deep_qnet_forward.1} parent=0 // pred_region
    _
  $region21: #{deep_qnet_forward.1} parent=0 // pred_fallthru
    _
  %v21 = vld [vmem:[%s0] sm:$0xf]
  %v22 = vld [vmem:[%s1] sm:$0xf]
  %v23 = vld [vmem:[%s1 + $0x4] sm:$0xf]
  %v24 = vld [vmem:[%s2] sm:$0x1]
  %v26 = vlaneseq
  %v27 = vshrl.u32 %v26, 7
  %v28 = vsub.s32 0, %v27
  %v29 = vrot.slane %v24, %v28
  %v33 = vunpack.c.l.b16 %v22
  %v34 = vunpack.c.l.b16 %v23
  %v35 = vpack.c.b16 %v34, %v33
  %vm37 = vcmask 130048
  %v39 = vsel %vm37, %v21, 0
  %41 = vmatprep.subr.bf16.mxu0 0
  %42 = vmatpush1.bf16.msra.mxu0 %v35
  %43 = vmatprep.subr.bf16.mxu0 0
  %44 = vmatpush1.bf16.msra.mxu0 0
  %45 = vmatprep.subr.bf16.mxu0 0
  %46 = vmatpush1.bf16.msra.mxu0 0
  %47 = vmatprep.subr.bf16.mxu0 0
  %48 = vmatpush1.bf16.msra.mxu0 0
  %49 = vmatprep.subr.bf16.mxu0 0
  %50 = vmatpush1.bf16.msra.mxu0 0
  %51 = vmatprep.subr.bf16.mxu0 0
  %52 = vmatpush1.bf16.msra.mxu0 0
  %53 = vmatprep.subr.bf16.mxu0 0
  %54 = vmatpush1.bf16.msra.mxu0 0
  %55 = vmatprep.subr.bf16.mxu0 0
  %56 = vmatpush1.bf16.msra.mxu0 0
  %57 = vmatprep.subr.bf16.mxu0 0
  %58 = vmatpush1.bf16.msra.mxu0 0
  %59 = vmatprep.subr.bf16.mxu0 0
  %60 = vmatpush1.bf16.msra.mxu0 0
  %61 = vmatprep.subr.bf16.mxu0 0
  %62 = vmatpush1.bf16.msra.mxu0 0
  %63 = vmatprep.subr.bf16.mxu0 0
  %64 = vmatpush1.bf16.msra.mxu0 0
  %65 = vmatprep.subr.bf16.mxu0 0
  %66 = vmatpush1.bf16.msra.mxu0 0
  %67 = vmatprep.subr.bf16.mxu0 0
  %68 = vmatpush1.bf16.msra.mxu0 0
  %69 = vmatprep.subr.bf16.mxu0 0
  %70 = vmatpush1.bf16.msra.mxu0 0
  %71 = vmatprep.subr.bf16.mxu0 0
  %72 = vmatpush1.bf16.msra.mxu0 0
  %73 = vmatprep.mubr.bf16.mxu0 0
  %74 = vmatmul.mubr.bf16.gmra.mrb[0].mxu0 %v39
  %v75 = vpop.f32.mrb[0].mxu0
  %v76 = vadd.f32 %v29, %v75
  %v77 = vpop.f32.mrb[0].mxu0
  %v78 = vpop.f32.mrb[0].mxu0
  %v79 = vpop.f32.mrb[0].mxu0
  %80 = vdwg.mxu0
  %v81 = vmax.f32 %v76, 0.0
  %v82 = vpack.c.bf16 %v81, %v81
  %v83 = vld [vmem:[%s3] sm:$0xf]
  %v84 = vld [vmem:[%s3 + $0x4] sm:$0xf]
  %v85 = vld [vmem:[%s3 + $0x8] sm:$0xf]
  %v86 = vld [vmem:[%s3 + $0xc] sm:$0xf]
  %v87 = vld [vmem:[%s3 + $0x10] sm:$0xf]
  %v88 = vld [vmem:[%s3 + $0x14] sm:$0xf]
  %v89 = vld [vmem:[%s3 + $0x18] sm:$0xf]
  %v90 = vld [vmem:[%s3 + $0x1c] sm:$0xf]
  %v91 = vld [vmem:[%s3 + $0x20] sm:$0xf]
  %v92 = vld [vmem:[%s3 + $0x24] sm:$0xf]
  %v93 = vld [vmem:[%s3 + $0x28] sm:$0xf]
  %v94 = vld [vmem:[%s3 + $0x2c] sm:$0xf]
  %v95 = vld [vmem:[%s3 + $0x30] sm:$0xf]
  %v96 = vld [vmem:[%s3 + $0x34] sm:$0xf]
  %v97 = vld [vmem:[%s3 + $0x38] sm:$0xf]
  %v98 = vld [vmem:[%s3 + $0x3c] sm:$0xf]
  %v99 = vld [vmem:[%s4] sm:$0x1]
  %v101 = vlaneseq
  %v102 = vshrl.u32 %v101, 7
  %v103 = vsub.s32 0, %v102
  %v104 = vrot.slane %v99, %v103
  %v122 = vunpack.c.l.b16 %v83
  %v123 = vunpack.c.l.b16 %v84
  %v124 = vunpack.c.l.b16 %v85
  %v125 = vunpack.c.l.b16 %v86
  %v126 = vunpack.c.l.b16 %v87
  %v127 = vunpack.c.l.b16 %v88
  %v128 = vunpack.c.l.b16 %v89
  %v129 = vunpack.c.l.b16 %v90
  %v130 = vunpack.c.l.b16 %v91
  %v131 = vunpack.c.l.b16 %v92
  %v132 = vunpack.c.l.b16 %v93
  %v133 = vunpack.c.l.b16 %v94
  %v134 = vunpack.c.l.b16 %v95
  %v135 = vunpack.c.l.b16 %v96
  %v136 = vunpack.c.l.b16 %v97
  %v137 = vunpack.c.l.b16 %v98
  %v138 = vpack.c.b16 %v123, %v122
  %v139 = vpack.c.b16 %v125, %v124
  %v140 = vpack.c.b16 %v127, %v126
  %v141 = vpack.c.b16 %v129, %v128
  %v142 = vpack.c.b16 %v131, %v130
  %v143 = vpack.c.b16 %v133, %v132
  %v144 = vpack.c.b16 %v135, %v134
  %v145 = vpack.c.b16 %v137, %v136
  %154 = vmatprep.subr.bf16.mxu0 0
  %155 = vmatpush1.bf16.msra.mxu0 %v138
  %156 = vmatprep.subr.bf16.mxu0 0
  %157 = vmatpush1.bf16.msra.mxu0 %v139
  %158 = vmatprep.subr.bf16.mxu0 0
  %159 = vmatpush1.bf16.msra.mxu0 %v140
  %160 = vmatprep.subr.bf16.mxu0 0
  %161 = vmatpush1.bf16.msra.mxu0 %v141
  %162 = vmatprep.subr.bf16.mxu0 0
  %163 = vmatpush1.bf16.msra.mxu0 %v142
  %164 = vmatprep.subr.bf16.mxu0 0
  %165 = vmatpush1.bf16.msra.mxu0 %v143
  %166 = vmatprep.subr.bf16.mxu0 0
  %167 = vmatpush1.bf16.msra.mxu0 %v144
  %168 = vmatprep.subr.bf16.mxu0 0
  %169 = vmatpush1.bf16.msra.mxu0 %v145
  %170 = vmatprep.subr.bf16.mxu0 0
  %171 = vmatpush1.bf16.msra.mxu0 0
  %172 = vmatprep.subr.bf16.mxu0 0
  %173 = vmatpush1.bf16.msra.mxu0 0
  %174 = vmatprep.subr.bf16.mxu0 0
  %175 = vmatpush1.bf16.msra.mxu0 0
  %176 = vmatprep.subr.bf16.mxu0 0
  %177 = vmatpush1.bf16.msra.mxu0 0
  %178 = vmatprep.subr.bf16.mxu0 0
  %179 = vmatpush1.bf16.msra.mxu0 0
  %180 = vmatprep.subr.bf16.mxu0 0
  %181 = vmatpush1.bf16.msra.mxu0 0
  %182 = vmatprep.subr.bf16.mxu0 0
  %183 = vmatpush1.bf16.msra.mxu0 0
  %184 = vmatprep.subr.bf16.mxu0 0
  %185 = vmatpush1.bf16.msra.mxu0 0
  %186 = vmatprep.mubr.bf16.mxu0 0
  %187 = vmatmul.mubr.bf16.gmra.mrb[0].mxu0 %v82
  %v188 = vpop.f32.mrb[0].mxu0
  %v189 = vadd.f32 %v104, %v188
  %v190 = vpop.f32.mrb[0].mxu0
  %v191 = vpop.f32.mrb[0].mxu0
  %v192 = vpop.f32.mrb[0].mxu0
  %193 = vdwg.mxu0
  %vm194 = vcmask 31744
  %195 = vst.msk [vmem:[%s5] sm:$0xff] %vm194, %v189
  // Predicated region
  $region22: #{deep_qnet_forward.1} parent=0 // pred_check
    _
  $region23: #{deep_qnet_forward.1} parent=0 // pred_check_branch
    %197 = sbr.rel (0) target = $region25
  $region24: #{deep_qnet_forward.1} parent=0 // pred_region
    _
  $region25: #{deep_qnet_forward.1} parent=0 // pred_fallthru
    _
  // Predicated region
  $region26: #{deep_qnet_forward.1} parent=0 // pred_check
    _
  $region27: #{deep_qnet_forward.1} parent=0 // pred_check_branch
    %199 = sbr.rel (0) target = $region29
  $region28: #{deep_qnet_forward.1} parent=0 // pred_region
    _
  $region29: #{deep_qnet_forward.1} parent=0 // pred_fallthru
    _

</llo_original>
